<compile_context>
chip_gen: v5e
topology: v5e:2x2
jax: 0.10.0
libtpu: 0.0.40
codegen_flags: <defaults>
</compile_context>

<pallas_src>
import functools

import jax
import jax.numpy as jnp
from jax.experimental import pallas as pl
from jax.experimental.pallas import tpu as pltpu


def _round_up(x, m):
    return ((x + m - 1) // m) * m


def _cdiv(a, b):
    return -(-a // b)


def zzzclsfier_kernel(z_ref,
                      w1_ref, b1_ref, w2_ref, b2_ref, w3_ref, b3_ref,
                      wh_ref, bh_ref,
                      mu_ref, sg_ref):
    """Fused 3x(Linear+ReLU) trunk + fused (mu||sigma) head for one batch tile.

    Lane-packed layout: PACK original rows of width F live in one row of
    Fp = PACK*F lanes; every weight is the block-diagonal kron(I_PACK, W), so
    the per-chunk math is byte-for-byte the original module's.

    z_ref  : [TB, Fp]    f32 activations
    wX_ref : [Fp, Fp]    bf16, pre-transposed [in, out], block-diagonal
    bX_ref : [1,  Fp]    f32
    wh_ref : [Fp, 2*Fp]  bf16, mu head || sigma head (fused)
    bh_ref : [1,  2*Fp]  f32
    mu_ref : [TB, Fp]    sg_ref : [TB, Fp]
    """
    mm_dtype = w1_ref.dtype
    h = z_ref[...].astype(jnp.float32)

    # trunk: 3x Linear + ReLU   (bf16 MXU matmuls, f32 accumulate + epilogue)
    h = jnp.maximum(
        jnp.dot(h.astype(mm_dtype), w1_ref[...],
                preferred_element_type=jnp.float32) + b1_ref[...], 0.0)
    # TODO(synk): training-mode dropout (p=0.2 / 0.1 / 0.1) not modeled; inference path only.
    h = jnp.maximum(
        jnp.dot(h.astype(mm_dtype), w2_ref[...],
                preferred_element_type=jnp.float32) + b2_ref[...], 0.0)
    h = jnp.maximum(
        jnp.dot(h.astype(mm_dtype), w3_ref[...],
                preferred_element_type=jnp.float32) + b3_ref[...], 0.0)

    # fused heads: one MXU pass producing [TB, 2*Fp] = [mu || s]
    hs = jnp.dot(h.astype(mm_dtype), wh_ref[...],
                 preferred_element_type=jnp.float32) + bh_ref[...]
    Fp = mu_ref.shape[-1]
    mu = hs[:, :Fp]
    s = hs[:, Fp:]

    # sigma: 0.1 + 0.9 * softplus(s)   (stable softplus, matches jax.nn.softplus)
    softplus = jnp.maximum(s, 0.0) + jnp.log1p(jnp.exp(-jnp.abs(s)))

    mu_ref[...] = mu.astype(mu_ref.dtype)
    sg_ref[...] = (0.1 + 0.9 * softplus).astype(sg_ref.dtype)


def pack_params(params, *, pack, matmul_dtype=jnp.bfloat16):
    """One-time prep: lane-pack weights (block-diag), fuse mu/sg heads, cast to bf16."""
    eye = jnp.eye(pack, dtype=jnp.float32)
    pw = lambda w: jnp.kron(eye, w).astype(matmul_dtype)               # [F,F] -> [pF,pF]
    pb = lambda b: jnp.tile(b.reshape(1, -1), (1, pack)).astype(jnp.float32)
    wh = jnp.concatenate([jnp.kron(eye, params["wmu"]),
                          jnp.kron(eye, params["wsg"])], axis=1).astype(matmul_dtype)
    bh = jnp.concatenate([pb(params["bmu"]), pb(params["bsg"])], axis=1)
    return {"w1": pw(params["w1"]), "b1": pb(params["b1"]),
            "w2": pw(params["w2"]), "b2": pb(params["b2"]),
            "w3": pw(params["w3"]), "b3": pb(params["b3"]),
            "wh": wh, "bh": bh}


@functools.partial(jax.jit, static_argnames=("pack", "tb"))
def _zzzclsfier_pallas(z, pp, *, pack, tb):
    B, F = z.shape
    Fp = pack * F

    # ---- batch tiling over lane-packed rows --------------------------------
    R = _cdiv(B, pack)                                    # packed rows needed
    tb_p = max(8, ((max(tb, pack) // pack) // 8) * 8)     # requested tile, mult of 8
    steps = _cdiv(R, tb_p)
    if steps < 2 and R > 8:
        steps = 2                                         # keep v7x's 2nd TC busy
    tile_p = _round_up(_cdiv(R, steps), 8)
    steps = _cdiv(R, tile_p)
    Rp = steps * tile_p
    Bp = Rp * pack

    if Bp != B:
        z = jnp.pad(z, ((0, Bp - B), (0, 0)))
    zp = z.reshape(Rp, Fp)                                # pure row-major view

    act_spec = pl.BlockSpec((tile_p, Fp), lambda i: (i, 0))    # tiled over batch
    w_spec = pl.BlockSpec((Fp, Fp), lambda i: (0, 0))          # VMEM-resident
    b_spec = pl.BlockSpec((1, Fp), lambda i: (0, 0))
    wh_spec = pl.BlockSpec((Fp, 2 * Fp), lambda i: (0, 0))
    bh_spec = pl.BlockSpec((1, 2 * Fp), lambda i: (0, 0))

    mu, sg = pl.pallas_call(
        zzzclsfier_kernel,
        out_shape=(jax.ShapeDtypeStruct((Rp, Fp), jnp.float32),
                   jax.ShapeDtypeStruct((Rp, Fp), jnp.float32)),
        grid=(steps,),
        in_specs=[act_spec,
                  w_spec, b_spec,     # zlayer
                  w_spec, b_spec,     # zlayer2
                  w_spec, b_spec,     # zlayer3
                  wh_spec, bh_spec],  # fused zlayermu || zlayersg
        out_specs=(act_spec, act_spec),
        compiler_params=pltpu.CompilerParams(
            dimension_semantics=("parallel",)),
    )(zp,
      pp["w1"], pp["b1"], pp["w2"], pp["b2"], pp["w3"], pp["b3"],
      pp["wh"], pp["bh"])

    mu = mu.reshape(Bp, F)[:B]
    sg = sg.reshape(Bp, F)[:B]
    return mu, sg


def zzzclsfier_forward(inputz, mc_times, domainid, packed_params, *, pack, tb=8192):
    """Matches zzzclsfier.forward(inputz, mc_times, domainid) -> (0, pzmu, pzsigma).

    mc_times / domainid are unused by the reference forward pass; kept for API parity.
    """
    del mc_times, domainid
    pzmu, pzsigma = _zzzclsfier_pallas(inputz, packed_params, pack=pack, tb=tb)
    return (0, pzmu, pzsigma)


def init_params(key, input_f):
    """Deterministic synthetic init matching the PyTorch Linear shapes.

    PyTorch stores Linear weights as [out, in]; we keep them pre-transposed
    ([in, out]) so the kernel does plain x @ W. Biases are [1, F].
    """
    keys = jax.random.split(key, 10)
    f32 = jnp.float32
    bound = 1.0 / jnp.sqrt(input_f)

    def lin(kw, kb):
        w = jax.random.uniform(kw, (input_f, input_f), f32, -bound, bound)
        b = jax.random.uniform(kb, (1, input_f), f32, -bound, bound)
        return w, b

    w1, b1 = lin(keys[0], keys[1])
    w2, b2 = lin(keys[2], keys[3])
    w3, b3 = lin(keys[4], keys[5])
    wmu, bmu = lin(keys[6], keys[7])
    wsg, bsg = lin(keys[8], keys[9])
    return {"w1": w1, "b1": b1, "w2": w2, "b2": b2, "w3": w3, "b3": b3,
            "wmu": wmu, "bmu": bmu, "wsg": wsg, "bsg": bsg}


def _reference(z, params, matmul_dtype=jnp.bfloat16):
    """Pure-JAX reference with the same bf16-matmul / f32-accumulate quantization."""
    def mm(x, w):
        return jnp.dot(x.astype(matmul_dtype), w.astype(matmul_dtype),
                       preferred_element_type=jnp.float32)
    relu = lambda a: jnp.maximum(a, 0.0)
    h = relu(mm(z, params["w1"]) + params["b1"])
    h = relu(mm(h, params["w2"]) + params["b2"])
    h = relu(mm(h, params["w3"]) + params["b3"])
    pzmu = mm(h, params["wmu"]) + params["bmu"]
    pzsigma = 0.1 + 0.9 * jax.nn.softplus(mm(h, params["wsg"]) + params["bsg"])
    return pzmu, pzsigma


if __name__ == "__main__":
    input_f = 32
    batch = 64   # -> 16 lane-packed rows -> 2 "parallel" grid steps of 8 rows

    key = jax.random.PRNGKey(0)
    kz, kp = jax.random.split(key, 2)

    z = jax.random.normal(kz, (batch, input_f), jnp.float32)
    params = init_params(kp, input_f)

    # pack 128//F batch rows into the 128-lane axis via block-diagonal weights
    pack = 128 // input_f if (input_f <= 128 and 128 % input_f == 0) else 1
    packed = pack_params(params, pack=pack, matmul_dtype=jnp.bfloat16)

    zero, pzmu, pzsigma = zzzclsfier_forward(z, mc_times=1, domainid=0,
                                             packed_params=packed,
                                             pack=pack, tb=32)
    pzmu = jax.block_until_ready(pzmu)
    pzsigma = jax.block_until_ready(pzsigma)

    # sanity vs a pure-JAX reference of the same (bf16-matmul) math
    ref_mu, ref_sg = _reference(z, params, jnp.bfloat16)
    assert zero == 0
    assert pzmu.shape == (batch, input_f)
    assert pzsigma.shape == (batch, input_f)
    assert jnp.allclose(pzmu, ref_mu, atol=1e-4, rtol=1e-4), "pzmu mismatch vs reference"
    assert jnp.allclose(pzsigma, ref_sg, atol=1e-4, rtol=1e-4), "pzsigma mismatch vs reference"

    print("KERNEL_OK")
</pallas_src>

<mosaic_0001>
module attributes {stable_mosaic.version = 11 : i64} {
  func.func @zzzclsfier_kernel(%arg0: i32, %arg1: memref<8x128xf32, #tpu.memory_space<vmem>>, %arg2: memref<128x128xbf16, #tpu.memory_space<vmem>>, %arg3: memref<1x128xf32, #tpu.memory_space<vmem>>, %arg4: memref<128x128xbf16, #tpu.memory_space<vmem>>, %arg5: memref<1x128xf32, #tpu.memory_space<vmem>>, %arg6: memref<128x128xbf16, #tpu.memory_space<vmem>>, %arg7: memref<1x128xf32, #tpu.memory_space<vmem>>, %arg8: memref<128x256xbf16, #tpu.memory_space<vmem>>, %arg9: memref<1x256xf32, #tpu.memory_space<vmem>>, %arg10: memref<8x128xf32, #tpu.memory_space<vmem>>, %arg11: memref<8x128xf32, #tpu.memory_space<vmem>>) attributes {dimension_semantics = [#tpu.dimension_semantics<parallel>], iteration_bounds = array<i64: 2>, scalar_prefetch = 0 : i64, scratch_operands = 0 : i64, tpu.core_type = #tpu.core_type<tc>, window_params = [{transform_indices = @transform_0, window_bounds = array<i64: 8, 128>}, {pipeline_mode = #tpu.pipeline_mode<synchronous>, transform_indices = @transform_1, window_bounds = array<i64: 128, 128>}, {pipeline_mode = #tpu.pipeline_mode<synchronous>, transform_indices = @transform_2, window_bounds = array<i64: 1, 128>}, {pipeline_mode = #tpu.pipeline_mode<synchronous>, transform_indices = @transform_3, window_bounds = array<i64: 128, 128>}, {pipeline_mode = #tpu.pipeline_mode<synchronous>, transform_indices = @transform_4, window_bounds = array<i64: 1, 128>}, {pipeline_mode = #tpu.pipeline_mode<synchronous>, transform_indices = @transform_5, window_bounds = array<i64: 128, 128>}, {pipeline_mode = #tpu.pipeline_mode<synchronous>, transform_indices = @transform_6, window_bounds = array<i64: 1, 128>}, {pipeline_mode = #tpu.pipeline_mode<synchronous>, transform_indices = @transform_7, window_bounds = array<i64: 128, 256>}, {pipeline_mode = #tpu.pipeline_mode<synchronous>, transform_indices = @transform_8, window_bounds = array<i64: 1, 256>}, {transform_indices = @transform_9, window_bounds = array<i64: 8, 128>}, {transform_indices = @transform_10, window_bounds = array<i64: 8, 128>}]} {
    %c0 = arith.constant 0 : index
    %c0_0 = arith.constant 0 : index
    %0 = vector.load %arg1[%c0, %c0_0] : memref<8x128xf32, #tpu.memory_space<vmem>>, vector<8x128xf32>
    %1 = arith.truncf %0 : vector<8x128xf32> to vector<8x128xbf16>
    %c0_1 = arith.constant 0 : index
    %c0_2 = arith.constant 0 : index
    %2 = vector.load %arg2[%c0_1, %c0_2] : memref<128x128xbf16, #tpu.memory_space<vmem>>, vector<128x128xbf16>
    %cst = arith.constant dense<0.000000e+00> : vector<8x128xf32>
    %3 = tpu.matmul %1, %2, %cst {dimension_numbers = #tpu.dot_dimension_numbers<[1], [0], [0], [1], [0, 0, 1, 1], [], []>} : vector<8x128xbf16>, vector<128x128xbf16>, vector<8x128xf32> -> vector<8x128xf32>
    %c0_3 = arith.constant 0 : index
    %c0_4 = arith.constant 0 : index
    %4 = vector.load %arg3[%c0_3, %c0_4] : memref<1x128xf32, #tpu.memory_space<vmem>>, vector<1x128xf32>
    %5 = vector.broadcast %4 : vector<1x128xf32> to vector<8x128xf32>
    %6 = arith.addf %3, %5 : vector<8x128xf32>
    %cst_5 = arith.constant 0.000000e+00 : f32
    %7 = vector.broadcast %cst_5 : f32 to vector<8x128xf32>
    %8 = arith.maximumf %6, %7 : vector<8x128xf32>
    %9 = arith.truncf %8 : vector<8x128xf32> to vector<8x128xbf16>
    %c0_6 = arith.constant 0 : index
    %c0_7 = arith.constant 0 : index
    %10 = vector.load %arg4[%c0_6, %c0_7] : memref<128x128xbf16, #tpu.memory_space<vmem>>, vector<128x128xbf16>
    %cst_8 = arith.constant dense<0.000000e+00> : vector<8x128xf32>
    %11 = tpu.matmul %9, %10, %cst_8 {dimension_numbers = #tpu.dot_dimension_numbers<[1], [0], [0], [1], [0, 0, 1, 1], [], []>} : vector<8x128xbf16>, vector<128x128xbf16>, vector<8x128xf32> -> vector<8x128xf32>
    %c0_9 = arith.constant 0 : index
    %c0_10 = arith.constant 0 : index
    %12 = vector.load %arg5[%c0_9, %c0_10] : memref<1x128xf32, #tpu.memory_space<vmem>>, vector<1x128xf32>
    %13 = vector.broadcast %12 : vector<1x128xf32> to vector<8x128xf32>
    %14 = arith.addf %11, %13 : vector<8x128xf32>
    %cst_11 = arith.constant 0.000000e+00 : f32
    %15 = vector.broadcast %cst_11 : f32 to vector<8x128xf32>
    %16 = arith.maximumf %14, %15 : vector<8x128xf32>
    %17 = arith.truncf %16 : vector<8x128xf32> to vector<8x128xbf16>
    %c0_12 = arith.constant 0 : index
    %c0_13 = arith.constant 0 : index
    %18 = vector.load %arg6[%c0_12, %c0_13] : memref<128x128xbf16, #tpu.memory_space<vmem>>, vector<128x128xbf16>
    %cst_14 = arith.constant dense<0.000000e+00> : vector<8x128xf32>
    %19 = tpu.matmul %17, %18, %cst_14 {dimension_numbers = #tpu.dot_dimension_numbers<[1], [0], [0], [1], [0, 0, 1, 1], [], []>} : vector<8x128xbf16>, vector<128x128xbf16>, vector<8x128xf32> -> vector<8x128xf32>
    %c0_15 = arith.constant 0 : index
    %c0_16 = arith.constant 0 : index
    %20 = vector.load %arg7[%c0_15, %c0_16] : memref<1x128xf32, #tpu.memory_space<vmem>>, vector<1x128xf32>
    %21 = vector.broadcast %20 : vector<1x128xf32> to vector<8x128xf32>
    %22 = arith.addf %19, %21 : vector<8x128xf32>
    %cst_17 = arith.constant 0.000000e+00 : f32
    %23 = vector.broadcast %cst_17 : f32 to vector<8x128xf32>
    %24 = arith.maximumf %22, %23 : vector<8x128xf32>
    %25 = arith.truncf %24 : vector<8x128xf32> to vector<8x128xbf16>
    %c0_18 = arith.constant 0 : index
    %c0_19 = arith.constant 0 : index
    %26 = vector.load %arg8[%c0_18, %c0_19] : memref<128x256xbf16, #tpu.memory_space<vmem>>, vector<128x256xbf16>
    %cst_20 = arith.constant dense<0.000000e+00> : vector<8x256xf32>
    %27 = tpu.matmul %25, %26, %cst_20 {dimension_numbers = #tpu.dot_dimension_numbers<[1], [0], [0], [1], [0, 0, 1, 1], [], []>} : vector<8x128xbf16>, vector<128x256xbf16>, vector<8x256xf32> -> vector<8x256xf32>
    %c0_21 = arith.constant 0 : index
    %c0_22 = arith.constant 0 : index
    %28 = vector.load %arg9[%c0_21, %c0_22] : memref<1x256xf32, #tpu.memory_space<vmem>>, vector<1x256xf32>
    %29 = vector.broadcast %28 : vector<1x256xf32> to vector<8x256xf32>
    %30 = arith.addf %27, %29 : vector<8x256xf32>
    %31 = vector.extract_strided_slice %30 {offsets = [0, 0], sizes = [8, 128], strides = [1, 1]} : vector<8x256xf32> to vector<8x128xf32>
    %32 = vector.extract_strided_slice %30 {offsets = [0, 128], sizes = [8, 128], strides = [1, 1]} : vector<8x256xf32> to vector<8x128xf32>
    %cst_23 = arith.constant 0.000000e+00 : f32
    %33 = vector.broadcast %cst_23 : f32 to vector<8x128xf32>
    %34 = arith.maximumf %32, %33 : vector<8x128xf32>
    %35 = math.absf %32 : vector<8x128xf32>
    %cst_24 = arith.constant 0.000000e+00 : f32
    %36 = vector.broadcast %cst_24 : f32 to vector<8x128xf32>
    %37 = arith.subf %36, %35 : vector<8x128xf32>
    %38 = math.exp %37 : vector<8x128xf32>
    %39 = math.log1p %38 : vector<8x128xf32>
    %40 = arith.addf %34, %39 : vector<8x128xf32>
    %c0_25 = arith.constant 0 : index
    %c0_26 = arith.constant 0 : index
    %41 = vector.load %arg10[%c0_25, %c0_26] : memref<8x128xf32, #tpu.memory_space<vmem>>, vector<8x128xf32>
    tpu.vector_store %arg10[%c0_25, %c0_26], %31 {strides = array<i32>} : memref<8x128xf32, #tpu.memory_space<vmem>>, vector<8x128xf32>,
    %cst_27 = arith.constant 0.899999976 : f32
    %42 = vector.broadcast %cst_27 : f32 to vector<8x128xf32>
    %43 = arith.mulf %42, %40 : vector<8x128xf32>
    %cst_28 = arith.constant 1.000000e-01 : f32
    %44 = vector.broadcast %cst_28 : f32 to vector<8x128xf32>
    %45 = arith.addf %44, %43 : vector<8x128xf32>
    %c0_29 = arith.constant 0 : index
    %c0_30 = arith.constant 0 : index
    %46 = vector.load %arg11[%c0_29, %c0_30] : memref<8x128xf32, #tpu.memory_space<vmem>>, vector<8x128xf32>
    tpu.vector_store %arg11[%c0_29, %c0_30], %45 {strides = array<i32>} : memref<8x128xf32, #tpu.memory_space<vmem>>, vector<8x128xf32>,
    return
  }
  func.func @transform_0(%arg0: i32) -> (i32, i32) {
    %c0_i32 = arith.constant 0 : i32
    %c0_i32_0 = arith.constant 0 : i32
    return %arg0, %c0_i32 : i32, i32
  }
  func.func @transform_1(%arg0: i32) -> (i32, i32) {
    %c0_i32 = arith.constant 0 : i32
    %c0_i32_0 = arith.constant 0 : i32
    %c0_i32_1 = arith.constant 0 : i32
    return %c0_i32, %c0_i32_0 : i32, i32
  }
  func.func @transform_2(%arg0: i32) -> (i32, i32) {
    %c0_i32 = arith.constant 0 : i32
    %c0_i32_0 = arith.constant 0 : i32
    %c0_i32_1 = arith.constant 0 : i32
    return %c0_i32, %c0_i32_0 : i32, i32
  }
  func.func @transform_3(%arg0: i32) -> (i32, i32) {
    %c0_i32 = arith.constant 0 : i32
    %c0_i32_0 = arith.constant 0 : i32
    %c0_i32_1 = arith.constant 0 : i32
    return %c0_i32, %c0_i32_0 : i32, i32
  }
  func.func @transform_4(%arg0: i32) -> (i32, i32) {
    %c0_i32 = arith.constant 0 : i32
    %c0_i32_0 = arith.constant 0 : i32
    %c0_i32_1 = arith.constant 0 : i32
    return %c0_i32, %c0_i32_0 : i32, i32
  }
  func.func @transform_5(%arg0: i32) -> (i32, i32) {
    %c0_i32 = arith.constant 0 : i32
    %c0_i32_0 = arith.constant 0 : i32
    %c0_i32_1 = arith.constant 0 : i32
    return %c0_i32, %c0_i32_0 : i32, i32
  }
  func.func @transform_6(%arg0: i32) -> (i32, i32) {
    %c0_i32 = arith.constant 0 : i32
    %c0_i32_0 = arith.constant 0 : i32
    %c0_i32_1 = arith.constant 0 : i32
    return %c0_i32, %c0_i32_0 : i32, i32
  }
  func.func @transform_7(%arg0: i32) -> (i32, i32) {
    %c0_i32 = arith.constant 0 : i32
    %c0_i32_0 = arith.constant 0 : i32
    %c0_i32_1 = arith.constant 0 : i32
    return %c0_i32, %c0_i32_0 : i32, i32
  }
  func.func @transform_8(%arg0: i32) -> (i32, i32) {
    %c0_i32 = arith.constant 0 : i32
    %c0_i32_0 = arith.constant 0 : i32
    %c0_i32_1 = arith.constant 0 : i32
    return %c0_i32, %c0_i32_0 : i32, i32
  }
  func.func @transform_9(%arg0: i32) -> (i32, i32) {
    %c0_i32 = arith.constant 0 : i32
    %c0_i32_0 = arith.constant 0 : i32
    return %arg0, %c0_i32 : i32, i32
  }
  func.func @transform_10(%arg0: i32) -> (i32, i32) {
    %c0_i32 = arith.constant 0 : i32
    %c0_i32_0 = arith.constant 0 : i32
    return %arg0, %c0_i32 : i32, i32
  }
}

</mosaic_0001>

<llo_original>
// kernel: _zzzclsfier_pallas.1
$region0: #{_zzzclsfier_pallas.1}
  #allocation0 [shape = 'u32[]', space=smem, size = 0x4, offset = 0x4, fixed_abs, tag = 'smem constant byte address 0x4 - core index']
  #allocation1 [shape = 'u32[72,128]{1,0:T(1,128)}', space=vmem, size = 0x9000, scoped, tag = 'internal scratch']
  %s0 = inlined_call_operand.vmem [shape: f32[16,128], index: 0, kind: input, shape index: {}]
  %s1 = inlined_call_operand.hbm [shape: bf16[128,128], index: 1, kind: input, shape index: {}]
  %s2 = inlined_call_operand.vmem [shape: f32[1,128], index: 2, kind: input, shape index: {}]
  %s3 = inlined_call_operand.hbm [shape: bf16[128,128], index: 3, kind: input, shape index: {}]
  %s4 = inlined_call_operand.vmem [shape: f32[1,128], index: 4, kind: input, shape index: {}]
  %s5 = inlined_call_operand.hbm [shape: bf16[128,128], index: 5, kind: input, shape index: {}]
  %s6 = inlined_call_operand.vmem [shape: f32[1,128], index: 6, kind: input, shape index: {}]
  %s7 = inlined_call_operand.vmem [shape: bf16[128,256], index: 7, kind: input, shape index: {}]
  %s8 = inlined_call_operand.vmem [shape: f32[1,256], index: 8, kind: input, shape index: {}]
  %s9 = inlined_call_operand.vmem [shape: f32[16,128], index: 9, kind: output, shape index: {0}]
  %s10 = inlined_call_operand.vmem [shape: f32[16,128], index: 10, kind: output, shape index: {1}]
  %11 = xla_tuple %s9, %s10
  %s12 = sld [smem:[#allocation0]]
  $region89: #{_zzzclsfier_pallas.1} parent=0
    _
  %s14 = ssub.s32 1, %s12
  %s15 = scalar_select 0, %s14, %s12
  $region1: #{_zzzclsfier_pallas.1} parent=0
    #allocation2 [shape = 'u8[32768]{0}', space=vmem, size = 0x8000, scoped, tag = 'input window, operand 1, single buffered']
    #allocation3 [shape = 's32[2]{0}', space=sflag, size = 0x8, scoped, tag = 'scoped memory for _zzzclsfier_pallas.1']
    #allocation4 [shape = 'u8[32768]{0}', space=vmem, size = 0x8000, scoped, tag = 'input window, operand 3, single buffered']
    #allocation5 [shape = 's32[1]{0}', space=sflag, size = 0x4, scoped, tag = 'scoped memory for _zzzclsfier_pallas.1']
    #allocation6 [shape = 'u8[32768]{0}', space=vmem, size = 0x8000, scoped, tag = 'input window, operand 5, single buffered']
    %16 = vsyncpa [#allocation3], 0
    %17 = vsyncpa [#allocation5], 0
    loop: start=0, step=1, limit=4
    $region2: #{_zzzclsfier_pallas.1} parent=1 // loop_pre_header
      _
    $region3: #{_zzzclsfier_pallas.1} parent=1 // loop_header
      %s19 = sphi 0, %s23
      %p20 = scmp.ge.s32.totalorder %s19, 4
      %s29 = sphi 0, %s31
      %s32 = sphi 0, %s29
      %s33 = sphi 0, %s32
      %s49 = sphi 0, %s33
      %s53 = sphi 0, %s53
      %s55 = sphi 0, %s53
      %s56 = sphi 0, %s55
      %s70 = sphi 0, %s56
      %s74 = sphi 0, %s74
      %s76 = sphi 0, %s74
      %s77 = sphi 0, %s76
      %s91 = sphi 0, %s77
      %s95 = sphi 0, %s95
      %s97 = sphi 0, %s95
      %s98 = sphi 0, %s97
      %s112 = sphi 0, %s98
      %s116 = sphi 0, %s116
      %s118 = sphi 0, %s116
      %s119 = sphi 0, %s118
      %s133 = sphi 0, %s119
      %s137 = sphi 0, %s137
      %s139 = sphi 0, %s137
      %s140 = sphi 0, %s139
      %s154 = sphi 0, %s140
      %s158 = sphi 0, %s158
      %s160 = sphi 0, %s158
      %s161 = sphi 0, %s160
      %s175 = sphi 0, %s161
      %s179 = sphi 0, %s179
      %s181 = sphi 0, %s179
      %s182 = sphi 0, %s181
      %s196 = sphi 0, %s182
      %s200 = sphi 0, %s200
      %s202 = sphi 0, %s200
      %s203 = sphi 0, %s202
      %s217 = sphi 0, %s203
      %s223 = sphi 0, %s225
      %s226 = sphi 0, %s223
      %s227 = sphi 0, %s226
      %s243 = sphi 0, %s227
      %s249 = sphi 0, %s251
      %s252 = sphi 0, %s249
      %s253 = sphi 0, %s252
      %s269 = sphi 0, %s253
    $region4: #{_zzzclsfier_pallas.1} parent=1 // loop_header_branch
      %22 = sbr.rel (%p20) target = $region8
    $region5: #{_zzzclsfier_pallas.1} parent=1 // loop_body
      %s24 = ssub.s32 %s19, 1
      %s25 = ssub.s32 %s19, 2
      %s26 = sadd.s32 %s19, 1
      %s27 = ssub.s32 %s19, %s26
      %p28 = scmp.eq.s32.totalorder %s27, 0
      %s30 = sadd.s32 %s29, 1
      %s31 = scalar_select %p28, %s29, %s30
      %p34 = pneg %p28
      %p35 = scmp.eq.s32.totalorder %s19, 1
      %p36 = por %p34, %p35
      %p37 = scmp.ne.s32.totalorder %s29, %s32
      %p38 = scmp.eq.s32.totalorder %s19, 0
      %p39 = por %p37, %p38
      %p40 = scmp.ne.s32.totalorder %s29, %s32
      %p41 = scmp.eq.s32.totalorder %s24, 1
      %p42 = por %p40, %p41
      %p43 = scmp.ne.s32.totalorder %s32, %s33
      %p44 = scmp.eq.s32.totalorder %s24, 0
      %p45 = por %p43, %p44
      %p46 = scmp.ne.s32.totalorder %s32, %s33
      %p47 = scmp.eq.s32.totalorder %s25, 1
      %p48 = por %p46, %p47
      %p50 = scmp.ne.s32.totalorder %s33, %s49
      %p51 = scmp.eq.s32.totalorder %s25, 0
      %p52 = por %p50, %p51
      %s54 = sadd.s32 %s53, 1
      %p57 = scmp.eq.s32.totalorder %s19, 1
      %p58 = scmp.ne.s32.totalorder %s53, %s55
      %p59 = scmp.eq.s32.totalorder %s19, 0
      %p60 = por %p58, %p59
      %p61 = scmp.ne.s32.totalorder %s53, %s55
      %p62 = scmp.eq.s32.totalorder %s24, 1
      %p63 = por %p61, %p62
      %p64 = scmp.ne.s32.totalorder %s55, %s56
      %p65 = scmp.eq.s32.totalorder %s24, 0
      %p66 = por %p64, %p65
      %p67 = scmp.ne.s32.totalorder %s55, %s56
      %p68 = scmp.eq.s32.totalorder %s25, 1
      %p69 = por %p67, %p68
      %p71 = scmp.ne.s32.totalorder %s56, %s70
      %p72 = scmp.eq.s32.totalorder %s25, 0
      %p73 = por %p71, %p72
      %s75 = sadd.s32 %s74, 1
      %p78 = scmp.eq.s32.totalorder %s19, 1
      %p79 = scmp.ne.s32.totalorder %s74, %s76
      %p80 = scmp.eq.s32.totalorder %s19, 0
      %p81 = por %p79, %p80
      %p82 = scmp.ne.s32.totalorder %s74, %s76
      %p83 = scmp.eq.s32.totalorder %s24, 1
      %p84 = por %p82, %p83
      %p85 = scmp.ne.s32.totalorder %s76, %s77
      %p86 = scmp.eq.s32.totalorder %s24, 0
      %p87 = por %p85, %p86
      %p88 = scmp.ne.s32.totalorder %s76, %s77
      %p89 = scmp.eq.s32.totalorder %s25, 1
      %p90 = por %p88, %p89
      %p92 = scmp.ne.s32.totalorder %s77, %s91
      %p93 = scmp.eq.s32.totalorder %s25, 0
      %p94 = por %p92, %p93
      %s96 = sadd.s32 %s95, 1
      %p99 = scmp.eq.s32.totalorder %s19, 1
      %p100 = scmp.ne.s32.totalorder %s95, %s97
      %p101 = scmp.eq.s32.totalorder %s19, 0
      %p102 = por %p100, %p101
      %p103 = scmp.ne.s32.totalorder %s95, %s97
      %p104 = scmp.eq.s32.totalorder %s24, 1
      %p105 = por %p103, %p104
      %p106 = scmp.ne.s32.totalorder %s97, %s98
      %p107 = scmp.eq.s32.totalorder %s24, 0
      %p108 = por %p106, %p107
      %p109 = scmp.ne.s32.totalorder %s97, %s98
      %p110 = scmp.eq.s32.totalorder %s25, 1
      %p111 = por %p109, %p110
      %p113 = scmp.ne.s32.totalorder %s98, %s112
      %p114 = scmp.eq.s32.totalorder %s25, 0
      %p115 = por %p113, %p114
      %s117 = sadd.s32 %s116, 1
      %p120 = scmp.eq.s32.totalorder %s19, 1
      %p121 = scmp.ne.s32.totalorder %s116, %s118
      %p122 = scmp.eq.s32.totalorder %s19, 0
      %p123 = por %p121, %p122
      %p124 = scmp.ne.s32.totalorder %s116, %s118
      %p125 = scmp.eq.s32.totalorder %s24, 1
      %p126 = por %p124, %p125
      %p127 = scmp.ne.s32.totalorder %s118, %s119
      %p128 = scmp.eq.s32.totalorder %s24, 0
      %p129 = por %p127, %p128
      %p130 = scmp.ne.s32.totalorder %s118, %s119
      %p131 = scmp.eq.s32.totalorder %s25, 1
      %p132 = por %p130, %p131
      %p134 = scmp.ne.s32.totalorder %s119, %s133
      %p135 = scmp.eq.s32.totalorder %s25, 0
      %p136 = por %p134, %p135
      %s138 = sadd.s32 %s137, 1
      %p141 = scmp.eq.s32.totalorder %s19, 1
      %p142 = scmp.ne.s32.totalorder %s137, %s139
      %p143 = scmp.eq.s32.totalorder %s19, 0
      %p144 = por %p142, %p143
      %p145 = scmp.ne.s32.totalorder %s137, %s139
      %p146 = scmp.eq.s32.totalorder %s24, 1
      %p147 = por %p145, %p146
      %p148 = scmp.ne.s32.totalorder %s139, %s140
      %p149 = scmp.eq.s32.totalorder %s24, 0
      %p150 = por %p148, %p149
      %p151 = scmp.ne.s32.totalorder %s139, %s140
      %p152 = scmp.eq.s32.totalorder %s25, 1
      %p153 = por %p151, %p152
      %p155 = scmp.ne.s32.totalorder %s140, %s154
      %p156 = scmp.eq.s32.totalorder %s25, 0
      %p157 = por %p155, %p156
      %s159 = sadd.s32 %s158, 1
      %p162 = scmp.eq.s32.totalorder %s19, 1
      %p163 = scmp.ne.s32.totalorder %s158, %s160
      %p164 = scmp.eq.s32.totalorder %s19, 0
      %p165 = por %p163, %p164
      %p166 = scmp.ne.s32.totalorder %s158, %s160
      %p167 = scmp.eq.s32.totalorder %s24, 1
      %p168 = por %p166, %p167
      %p169 = scmp.ne.s32.totalorder %s160, %s161
      %p170 = scmp.eq.s32.totalorder %s24, 0
      %p171 = por %p169, %p170
      %p172 = scmp.ne.s32.totalorder %s160, %s161
      %p173 = scmp.eq.s32.totalorder %s25, 1
      %p174 = por %p172, %p173
      %p176 = scmp.ne.s32.totalorder %s161, %s175
      %p177 = scmp.eq.s32.totalorder %s25, 0
      %p178 = por %p176, %p177
      %s180 = sadd.s32 %s179, 1
      %p183 = scmp.eq.s32.totalorder %s19, 1
      %p184 = scmp.ne.s32.totalorder %s179, %s181
      %p185 = scmp.eq.s32.totalorder %s19, 0
      %p186 = por %p184, %p185
      %p187 = scmp.ne.s32.totalorder %s179, %s181
      %p188 = scmp.eq.s32.totalorder %s24, 1
      %p189 = por %p187, %p188
      %p190 = scmp.ne.s32.totalorder %s181, %s182
      %p191 = scmp.eq.s32.totalorder %s24, 0
      %p192 = por %p190, %p191
      %p193 = scmp.ne.s32.totalorder %s181, %s182
      %p194 = scmp.eq.s32.totalorder %s25, 1
      %p195 = por %p193, %p194
      %p197 = scmp.ne.s32.totalorder %s182, %s196
      %p198 = scmp.eq.s32.totalorder %s25, 0
      %p199 = por %p197, %p198
      %s201 = sadd.s32 %s200, 1
      %p204 = scmp.eq.s32.totalorder %s19, 1
      %p205 = scmp.ne.s32.totalorder %s200, %s202
      %p206 = scmp.eq.s32.totalorder %s19, 0
      %p207 = por %p205, %p206
      %p208 = scmp.ne.s32.totalorder %s200, %s202
      %p209 = scmp.eq.s32.totalorder %s24, 1
      %p210 = por %p208, %p209
      %p211 = scmp.ne.s32.totalorder %s202, %s203
      %p212 = scmp.eq.s32.totalorder %s24, 0
      %p213 = por %p211, %p212
      %p214 = scmp.ne.s32.totalorder %s202, %s203
      %p215 = scmp.eq.s32.totalorder %s25, 1
      %p216 = por %p214, %p215
      %p218 = scmp.ne.s32.totalorder %s203, %s217
      %p219 = scmp.eq.s32.totalorder %s25, 0
      %p220 = por %p218, %p219
      %s221 = ssub.s32 %s19, %s26
      %p222 = scmp.eq.s32.totalorder %s221, 0
      %s224 = sadd.s32 %s223, 1
      %s225 = scalar_select %p222, %s223, %s224
      %p228 = pneg %p222
      %p229 = scmp.eq.s32.totalorder %s19, 1
      %p230 = por %p228, %p229
      %p231 = scmp.ne.s32.totalorder %s223, %s226
      %p232 = scmp.eq.s32.totalorder %s19, 0
      %p233 = por %p231, %p232
      %p234 = scmp.ne.s32.totalorder %s223, %s226
      %p235 = scmp.eq.s32.totalorder %s24, 1
      %p236 = por %p234, %p235
      %p237 = scmp.ne.s32.totalorder %s226, %s227
      %p238 = scmp.eq.s32.totalorder %s24, 0
      %p239 = por %p237, %p238
      %p240 = scmp.ne.s32.totalorder %s226, %s227
      %p241 = scmp.eq.s32.totalorder %s25, 1
      %p242 = por %p240, %p241
      %p244 = scmp.ne.s32.totalorder %s227, %s243
      %p245 = scmp.eq.s32.totalorder %s25, 0
      %p246 = por %p244, %p245
      %s247 = ssub.s32 %s19, %s26
      %p248 = scmp.eq.s32.totalorder %s247, 0
      %s250 = sadd.s32 %s249, 1
      %s251 = scalar_select %p248, %s249, %s250
      %p254 = pneg %p248
      %p255 = scmp.eq.s32.totalorder %s19, 1
      %p256 = por %p254, %p255
      %p257 = scmp.ne.s32.totalorder %s249, %s252
      %p258 = scmp.eq.s32.totalorder %s19, 0
      %p259 = por %p257, %p258
      %p260 = scmp.ne.s32.totalorder %s249, %s252
      %p261 = scmp.eq.s32.totalorder %s24, 1
      %p262 = por %p260, %p261
      %p263 = scmp.ne.s32.totalorder %s252, %s253
      %p264 = scmp.eq.s32.totalorder %s24, 0
      %p265 = por %p263, %p264
      %p266 = scmp.ne.s32.totalorder %s252, %s253
      %p267 = scmp.eq.s32.totalorder %s25, 1
      %p268 = por %p266, %p267
      %p270 = scmp.ne.s32.totalorder %s253, %s269
      %p271 = scmp.eq.s32.totalorder %s25, 0
      %p272 = por %p270, %p271
      %p273 = scmp.le.s32.totalorder 1, %s19
      %p274 = scmp.lt.s32.totalorder %s19, 3
      %p275 = pnand %p273, %p274
      %p276 = pneg %p275
      // Predicated region
      $region9: #{_zzzclsfier_pallas.1} parent=5 // pred_check
        _
      $region10: #{_zzzclsfier_pallas.1} parent=5 // pred_check_branch
        %278 = sbr.rel (%p275) target = $region12
      $region11: #{_zzzclsfier_pallas.1} parent=5 // pred_region
        %s279 = ssub.s32 %s19, 1
        // Predicated region
        $region13: #{_zzzclsfier_pallas.1} parent=11 // pred_check
          %p280 = pneg %p66
        $region14: #{_zzzclsfier_pallas.1} parent=11 // pred_check_branch
          %282 = sbr.rel (%p280) target = $region16
        $region15: #{_zzzclsfier_pallas.1} parent=11 // pred_region
          %284 = vsyncadd [#allocation3], 0
          %s285 = sshll.u32 %s1, 4
          %s286 = int_to_ptr.hbm [resolvable:$true] %s285
          %s287 = sshll.u32 [#allocation2], 4
          %s288 = int_to_ptr.vmem [resolvable:$true] %s287
          %293 = dma.hbm_to_vmem [thread:$0]  %s286, 1024, %s288, [#allocation3], 64, 64, 4
        $region16: #{_zzzclsfier_pallas.1} parent=11 // pred_fallthru
          _
        // Predicated region
        $region17: #{_zzzclsfier_pallas.1} parent=11 // pred_check
          %p294 = pneg %p87
        $region18: #{_zzzclsfier_pallas.1} parent=11 // pred_check_branch
          %296 = sbr.rel (%p294) target = $region20
        $region19: #{_zzzclsfier_pallas.1} parent=11 // pred_region
          _
        $region20: #{_zzzclsfier_pallas.1} parent=11 // pred_fallthru
          _
        // Predicated region
        $region21: #{_zzzclsfier_pallas.1} parent=11 // pred_check
          %p297 = pneg %p108
        $region22: #{_zzzclsfier_pallas.1} parent=11 // pred_check_branch
          %299 = sbr.rel (%p297) target = $region24
        $region23: #{_zzzclsfier_pallas.1} parent=11 // pred_region
          %301 = vsyncadd [#allocation5], 0
          %s302 = sshll.u32 %s3, 4
          %s303 = int_to_ptr.hbm [resolvable:$true] %s302
          %s304 = sshll.u32 [#allocation4], 4
          %s305 = int_to_ptr.vmem [resolvable:$true] %s304
          %310 = dma.hbm_to_vmem [thread:$0]  %s303, 1024, %s305, [#allocation5], 64, 64, 4
        $region24: #{_zzzclsfier_pallas.1} parent=11 // pred_fallthru
          _
        // Predicated region
        $region25: #{_zzzclsfier_pallas.1} parent=11 // pred_check
          %p311 = pneg %p129
        $region26: #{_zzzclsfier_pallas.1} parent=11 // pred_check_branch
          %313 = sbr.rel (%p311) target = $region28
        $region27: #{_zzzclsfier_pallas.1} parent=11 // pred_region
          _
        $region28: #{_zzzclsfier_pallas.1} parent=11 // pred_fallthru
          _
        // Predicated region
        $region29: #{_zzzclsfier_pallas.1} parent=11 // pred_check
          %p314 = pneg %p150
        $region30: #{_zzzclsfier_pallas.1} parent=11 // pred_check_branch
          %316 = sbr.rel (%p314) target = $region32
        $region31: #{_zzzclsfier_pallas.1} parent=11 // pred_region
          %318 = vsyncadd [#allocation5], 0
          %s319 = sshll.u32 %s5, 4
          %s320 = int_to_ptr.hbm [resolvable:$true] %s319
          %s321 = sshll.u32 [#allocation6], 4
          %s322 = int_to_ptr.vmem [resolvable:$true] %s321
          %327 = dma.hbm_to_vmem [thread:$0]  %s320, 1024, %s322, [#allocation5], 64, 64, 4
        $region32: #{_zzzclsfier_pallas.1} parent=11 // pred_fallthru
          _
        // Predicated region
        $region33: #{_zzzclsfier_pallas.1} parent=11 // pred_check
          %p328 = pneg %p171
        $region34: #{_zzzclsfier_pallas.1} parent=11 // pred_check_branch
          %330 = sbr.rel (%p328) target = $region36
        $region35: #{_zzzclsfier_pallas.1} parent=11 // pred_region
          _
        $region36: #{_zzzclsfier_pallas.1} parent=11 // pred_fallthru
          _
        // Predicated region
        $region37: #{_zzzclsfier_pallas.1} parent=11 // pred_check
          %p331 = pneg %p192
        $region38: #{_zzzclsfier_pallas.1} parent=11 // pred_check_branch
          %333 = sbr.rel (%p331) target = $region40
        $region39: #{_zzzclsfier_pallas.1} parent=11 // pred_region
          _
        $region40: #{_zzzclsfier_pallas.1} parent=11 // pred_fallthru
          _
        // Predicated region
        $region41: #{_zzzclsfier_pallas.1} parent=11 // pred_check
          %p334 = pneg %p213
        $region42: #{_zzzclsfier_pallas.1} parent=11 // pred_check_branch
          %336 = sbr.rel (%p334) target = $region44
        $region43: #{_zzzclsfier_pallas.1} parent=11 // pred_region
          _
        $region44: #{_zzzclsfier_pallas.1} parent=11 // pred_fallthru
          _
      $region12: #{_zzzclsfier_pallas.1} parent=5 // pred_fallthru
        _
      %p337 = scmp.lt.s32.totalorder %s19, 2
      // Predicated region
      $region45: #{_zzzclsfier_pallas.1} parent=5 // pred_check
        %p338 = pneg %p337
      $region46: #{_zzzclsfier_pallas.1} parent=5 // pred_check_branch
        %340 = sbr.rel (%p338) target = $region48
      $region47: #{_zzzclsfier_pallas.1} parent=5 // pred_region
        // Predicated region
        $region49: #{_zzzclsfier_pallas.1} parent=47 // pred_check
          %p341 = pneg %p39
        $region50: #{_zzzclsfier_pallas.1} parent=47 // pred_check_branch
          %343 = sbr.rel (%p341) target = $region52
        $region51: #{_zzzclsfier_pallas.1} parent=47 // pred_region
          %p344 = scmp.lt.s32.totalorder %s19, 1
          %s345 = scalar_select %p344, %s19, 1
          %s346 = smul.addr %s345, 8
          %s347 = scalar_lea.vmem %s0, %s346
        $region52: #{_zzzclsfier_pallas.1} parent=47 // pred_fallthru
          _
      $region48: #{_zzzclsfier_pallas.1} parent=5 // pred_fallthru
        _
      %p348 = scmp.le.s32.totalorder 1, %s19
      %p349 = scmp.lt.s32.totalorder %s19, 3
      %p350 = pnand %p348, %p349
      %p351 = pneg %p350
      // Predicated region
      $region53: #{_zzzclsfier_pallas.1} parent=5 // pred_check
        _
      $region54: #{_zzzclsfier_pallas.1} parent=5 // pred_check_branch
        %353 = sbr.rel (%p350) target = $region56
      $region55: #{_zzzclsfier_pallas.1} parent=5 // pred_region
        %s354 = ssub.s32 %s19, 1
        // Predicated region
        $region57: #{_zzzclsfier_pallas.1} parent=55 // pred_check
          %p355 = pneg %p66
        $region58: #{_zzzclsfier_pallas.1} parent=55 // pred_check_branch
          %357 = sbr.rel (%p355) target = $region60
        $region59: #{_zzzclsfier_pallas.1} parent=55 // pred_region
          %359 = dma.done [#allocation3], 1024
        $region60: #{_zzzclsfier_pallas.1} parent=55 // pred_fallthru
          _
        // Predicated region
        $region61: #{_zzzclsfier_pallas.1} parent=55 // pred_check
          %p360 = pneg %p108
        $region62: #{_zzzclsfier_pallas.1} parent=55 // pred_check_branch
          %362 = sbr.rel (%p360) target = $region64
        $region63: #{_zzzclsfier_pallas.1} parent=55 // pred_region
          %364 = dma.done [#allocation5], 1024
        $region64: #{_zzzclsfier_pallas.1} parent=55 // pred_fallthru
          _
        // Predicated region
        $region65: #{_zzzclsfier_pallas.1} parent=55 // pred_check
          %p365 = pneg %p150
        $region66: #{_zzzclsfier_pallas.1} parent=55 // pred_check_branch
          %367 = sbr.rel (%p365) target = $region68
        $region67: #{_zzzclsfier_pallas.1} parent=55 // pred_region
          %369 = dma.done [#allocation5], 1024
        $region68: #{_zzzclsfier_pallas.1} parent=55 // pred_fallthru
          _
        %p370 = scmp.lt.s32.totalorder %s24, 1
        %s371 = scalar_select %p370, %s24, 1
        %s372 = smul.addr %s371, 8
        %s373 = scalar_lea.vmem %s0, %s372
        %p374 = pneg %p45
        %p375 = pneg %p42
        %p376 = pneg %p66
        %p377 = pneg %p63
        %p378 = pneg %p87
        %p379 = pneg %p84
        %p380 = pneg %p108
        %p381 = pneg %p105
        %p382 = pneg %p129
        %p383 = pneg %p126
        %p384 = pneg %p150
        %p385 = pneg %p147
        %p386 = pneg %p171
        %p387 = pneg %p168
        %p388 = pneg %p192
        %p389 = pneg %p189
        %p390 = pneg %p213
        %p391 = pneg %p210
        %p392 = pneg %p239
        %p393 = pneg %p236
        %p394 = scmp.lt.s32.totalorder %s24, 1
        %s395 = scalar_select %p394, %s24, 1
        %s396 = smul.addr %s395, 8
        %s397 = scalar_lea.vmem %s9, %s396
        %p398 = pneg %p265
        %p399 = pneg %p262
        %p400 = scmp.lt.s32.totalorder %s24, 1
        %s401 = scalar_select %p400, %s24, 1
        %s402 = smul.addr %s401, 8
        %s403 = scalar_lea.vmem %s10, %s402
        %p404 = scmp.lt.s32.totalorder %s24, 1
        %s405 = scalar_select %p404, %s24, 1
        %s406 = smul.addr %s405, 8
        %s407 = scalar_lea.vmem %s0, %s406
        %p408 = scmp.lt.s32.totalorder %s24, 1
        %s409 = scalar_select %p408, %s24, 1
        %s410 = smul.addr %s409, 8
        %s411 = scalar_lea.vmem %s9, %s410
        %p412 = scmp.lt.s32.totalorder %s24, 1
        %s413 = scalar_select %p412, %s24, 1
        %s414 = smul.addr %s413, 8
        %s415 = scalar_lea.vmem %s10, %s414
        %v416 = vld [vmem:[%s407] sm:$0xff]
        %v417 = vpack.c.bf16 %v416, %v416
        %v418 = vld [vmem:[#allocation2] sm:$0xf]
        %v419 = vld [vmem:[#allocation2 + $0x4] sm:$0xf]
        %v420 = vld [vmem:[#allocation2 + $0x8] sm:$0xf]
        %v421 = vld [vmem:[#allocation2 + $0xc] sm:$0xf]
        %v422 = vld [vmem:[#allocation2 + $0x10] sm:$0xf]
        %v423 = vld [vmem:[#allocation2 + $0x14] sm:$0xf]
        %v424 = vld [vmem:[#allocation2 + $0x18] sm:$0xf]
        %v425 = vld [vmem:[#allocation2 + $0x1c] sm:$0xf]
        %v426 = vld [vmem:[#allocation2 + $0x20] sm:$0xf]
        %v427 = vld [vmem:[#allocation2 + $0x24] sm:$0xf]
        %v428 = vld [vmem:[#allocation2 + $0x28] sm:$0xf]
        %v429 = vld [vmem:[#allocation2 + $0x2c] sm:$0xf]
        %v430 = vld [vmem:[#allocation2 + $0x30] sm:$0xf]
        %v431 = vld [vmem:[#allocation2 + $0x34] sm:$0xf]
        %v432 = vld [vmem:[#allocation2 + $0x38] sm:$0xf]
        %v433 = vld [vmem:[#allocation2 + $0x3c] sm:$0xf]
        %v434 = vld [vmem:[%s2] sm:$0x1]
        %v436 = vperm.slane %v434, 0
        %v454 = vunpack.c.l.b16 %v418
        %v455 = vunpack.c.l.b16 %v419
        %v456 = vunpack.c.l.b16 %v420
        %v457 = vunpack.c.l.b16 %v421
        %v458 = vunpack.c.l.b16 %v422
        %v459 = vunpack.c.l.b16 %v423
        %v460 = vunpack.c.l.b16 %v424
        %v461 = vunpack.c.l.b16 %v425
        %v462 = vunpack.c.l.b16 %v426
        %v463 = vunpack.c.l.b16 %v427
        %v464 = vunpack.c.l.b16 %v428
        %v465 = vunpack.c.l.b16 %v429
        %v466 = vunpack.c.l.b16 %v430
        %v467 = vunpack.c.l.b16 %v431
        %v468 = vunpack.c.l.b16 %v432
        %v469 = vunpack.c.l.b16 %v433
        %v470 = vpack.c.b16 %v455, %v454
        %v471 = vpack.c.b16 %v457, %v456
        %v472 = vpack.c.b16 %v459, %v458
        %v473 = vpack.c.b16 %v461, %v460
        %v474 = vpack.c.b16 %v463, %v462
        %v475 = vpack.c.b16 %v465, %v464
        %v476 = vpack.c.b16 %v467, %v466
        %v477 = vpack.c.b16 %v469, %v468
        %486 = vmatpush.bf16.msra.mxu0 %v477
        %487 = vmatpush.bf16.msra.mxu0 %v476
        %488 = vmatpush.bf16.msra.mxu0 %v475
        %489 = vmatpush.bf16.msra.mxu0 %v474
        %490 = vmatpush.bf16.msra.mxu0 %v473
        %491 = vmatpush.bf16.msra.mxu0 %v472
        %492 = vmatpush.bf16.msra.mxu0 %v471
        %493 = vmatpush.bf16.msra.mxu0 %v470
        %494 = vmatmul.bf16.gmra.mxu0 %v417
        %v495 = vpop.f32.mrf.mxu0
        %v496 = vadd.f32 %v436, %v495
        %v497 = vpop.f32.mrf.mxu0
        %498 = vdwg.mxu0
        %v499 = vmax.f32 %v496, 0.0
        %v500 = vpack.c.bf16 %v499, %v499
        %v501 = vld [vmem:[#allocation4] sm:$0xf]
        %v502 = vld [vmem:[#allocation4 + $0x4] sm:$0xf]
        %v503 = vld [vmem:[#allocation4 + $0x8] sm:$0xf]
        %v504 = vld [vmem:[#allocation4 + $0xc] sm:$0xf]
        %v505 = vld [vmem:[#allocation4 + $0x10] sm:$0xf]
        %v506 = vld [vmem:[#allocation4 + $0x14] sm:$0xf]
        %v507 = vld [vmem:[#allocation4 + $0x18] sm:$0xf]
        %v508 = vld [vmem:[#allocation4 + $0x1c] sm:$0xf]
        %v509 = vld [vmem:[#allocation4 + $0x20] sm:$0xf]
        %v510 = vld [vmem:[#allocation4 + $0x24] sm:$0xf]
        %v511 = vld [vmem:[#allocation4 + $0x28] sm:$0xf]
        %v512 = vld [vmem:[#allocation4 + $0x2c] sm:$0xf]
        %v513 = vld [vmem:[#allocation4 + $0x30] sm:$0xf]
        %v514 = vld [vmem:[#allocation4 + $0x34] sm:$0xf]
        %v515 = vld [vmem:[#allocation4 + $0x38] sm:$0xf]
        %v516 = vld [vmem:[#allocation4 + $0x3c] sm:$0xf]
        %v517 = vld [vmem:[%s4] sm:$0x1]
        %v519 = vperm.slane %v517, 0
        %v537 = vunpack.c.l.b16 %v501
        %v538 = vunpack.c.l.b16 %v502
        %v539 = vunpack.c.l.b16 %v503
        %v540 = vunpack.c.l.b16 %v504
        %v541 = vunpack.c.l.b16 %v505
        %v542 = vunpack.c.l.b16 %v506
        %v543 = vunpack.c.l.b16 %v507
        %v544 = vunpack.c.l.b16 %v508
        %v545 = vunpack.c.l.b16 %v509
        %v546 = vunpack.c.l.b16 %v510
        %v547 = vunpack.c.l.b16 %v511
        %v548 = vunpack.c.l.b16 %v512
        %v549 = vunpack.c.l.b16 %v513
        %v550 = vunpack.c.l.b16 %v514
        %v551 = vunpack.c.l.b16 %v515
        %v552 = vunpack.c.l.b16 %v516
        %v553 = vpack.c.b16 %v538, %v537
        %v554 = vpack.c.b16 %v540, %v539
        %v555 = vpack.c.b16 %v542, %v541
        %v556 = vpack.c.b16 %v544, %v543
        %v557 = vpack.c.b16 %v546, %v545
        %v558 = vpack.c.b16 %v548, %v547
        %v559 = vpack.c.b16 %v550, %v549
        %v560 = vpack.c.b16 %v552, %v551
        %569 = vmatpush.bf16.msra.mxu0 %v560
        %570 = vmatpush.bf16.msra.mxu0 %v559
        %571 = vmatpush.bf16.msra.mxu0 %v558
        %572 = vmatpush.bf16.msra.mxu0 %v557
        %573 = vmatpush.bf16.msra.mxu0 %v556
        %574 = vmatpush.bf16.msra.mxu0 %v555
        %575 = vmatpush.bf16.msra.mxu0 %v554
        %576 = vmatpush.bf16.msra.mxu0 %v553
        %577 = vmatmul.bf16.gmra.mxu0 %v500
        %v578 = vpop.f32.mrf.mxu0
        %v579 = vadd.f32 %v519, %v578
        %v580 = vpop.f32.mrf.mxu0
        %581 = vdwg.mxu0
        %v582 = vmax.f32 %v579, 0.0
        %v583 = vpack.c.bf16 %v582, %v582
        %v584 = vld [vmem:[#allocation6] sm:$0xf]
        %v585 = vld [vmem:[#allocation6 + $0x4] sm:$0xf]
        %v586 = vld [vmem:[#allocation6 + $0x8] sm:$0xf]
        %v587 = vld [vmem:[#allocation6 + $0xc] sm:$0xf]
        %v588 = vld [vmem:[#allocation6 + $0x10] sm:$0xf]
        %v589 = vld [vmem:[#allocation6 + $0x14] sm:$0xf]
        %v590 = vld [vmem:[#allocation6 + $0x18] sm:$0xf]
        %v591 = vld [vmem:[#allocation6 + $0x1c] sm:$0xf]
        %v592 = vld [vmem:[#allocation6 + $0x20] sm:$0xf]
        %v593 = vld [vmem:[#allocation6 + $0x24] sm:$0xf]
        %v594 = vld [vmem:[#allocation6 + $0x28] sm:$0xf]
        %v595 = vld [vmem:[#allocation6 + $0x2c] sm:$0xf]
        %v596 = vld [vmem:[#allocation6 + $0x30] sm:$0xf]
        %v597 = vld [vmem:[#allocation6 + $0x34] sm:$0xf]
        %v598 = vld [vmem:[#allocation6 + $0x38] sm:$0xf]
        %v599 = vld [vmem:[#allocation6 + $0x3c] sm:$0xf]
        %v600 = vld [vmem:[%s6] sm:$0x1]
        %v602 = vperm.slane %v600, 0
        %v620 = vunpack.c.l.b16 %v584
        %v621 = vunpack.c.l.b16 %v585
        %v622 = vunpack.c.l.b16 %v586
        %v623 = vunpack.c.l.b16 %v587
        %v624 = vunpack.c.l.b16 %v588
        %v625 = vunpack.c.l.b16 %v589
        %v626 = vunpack.c.l.b16 %v590
        %v627 = vunpack.c.l.b16 %v591
        %v628 = vunpack.c.l.b16 %v592
        %v629 = vunpack.c.l.b16 %v593
        %v630 = vunpack.c.l.b16 %v594
        %v631 = vunpack.c.l.b16 %v595
        %v632 = vunpack.c.l.b16 %v596
        %v633 = vunpack.c.l.b16 %v597
        %v634 = vunpack.c.l.b16 %v598
        %v635 = vunpack.c.l.b16 %v599
        %v636 = vpack.c.b16 %v621, %v620
        %v637 = vpack.c.b16 %v623, %v622
        %v638 = vpack.c.b16 %v625, %v624
        %v639 = vpack.c.b16 %v627, %v626
        %v640 = vpack.c.b16 %v629, %v628
        %v641 = vpack.c.b16 %v631, %v630
        %v642 = vpack.c.b16 %v633, %v632
        %v643 = vpack.c.b16 %v635, %v634
        %652 = vmatpush.bf16.msra.mxu0 %v643
        %653 = vmatpush.bf16.msra.mxu0 %v642
        %654 = vmatpush.bf16.msra.mxu0 %v641
        %655 = vmatpush.bf16.msra.mxu0 %v640
        %656 = vmatpush.bf16.msra.mxu0 %v639
        %657 = vmatpush.bf16.msra.mxu0 %v638
        %658 = vmatpush.bf16.msra.mxu0 %v637
        %659 = vmatpush.bf16.msra.mxu0 %v636
        %660 = vmatmul.bf16.gmra.mxu0 %v583
        %v661 = vpop.f32.mrf.mxu0
        %v662 = vadd.f32 %v602, %v661
        %v663 = vpop.f32.mrf.mxu0
        %664 = vdwg.mxu0
        %v665 = vmax.f32 %v662, 0.0
        %v666 = vpack.c.bf16 %v665, %v665
        %v667 = vld [vmem:[%s7] sm:$0xff]
        %v668 = vld [vmem:[%s7 + $0x8] sm:$0xff]
        %v669 = vld [vmem:[%s7 + $0x10] sm:$0xff]
        %v670 = vld [vmem:[%s7 + $0x18] sm:$0xff]
        %v671 = vld [vmem:[%s7 + $0x20] sm:$0xff]
        %v672 = vld [vmem:[%s7 + $0x28] sm:$0xff]
        %v673 = vld [vmem:[%s7 + $0x30] sm:$0xff]
        %v674 = vld [vmem:[%s7 + $0x38] sm:$0xff]
        %v675 = vld [vmem:[%s7 + $0x40] sm:$0xff]
        %v676 = vld [vmem:[%s7 + $0x48] sm:$0xff]
        %v677 = vld [vmem:[%s7 + $0x50] sm:$0xff]
        %v678 = vld [vmem:[%s7 + $0x58] sm:$0xff]
        %v679 = vld [vmem:[%s7 + $0x60] sm:$0xff]
        %v680 = vld [vmem:[%s7 + $0x68] sm:$0xff]
        %v681 = vld [vmem:[%s7 + $0x70] sm:$0xff]
        %v682 = vld [vmem:[%s7 + $0x78] sm:$0xff]
        %v683 = vld [vmem:[%s8] sm:$0x3]
        %v685 = vperm.slane %v683, 0
        %v686 = vperm.slane %v683, 1
        %v705 = vunpack.c.l.b16 %v667
        %v706 = vunpack.c.h.b16 %v667
        %v707 = vunpack.c.l.b16 %v668
        %v708 = vunpack.c.h.b16 %v668
        %v709 = vunpack.c.l.b16 %v669
        %v710 = vunpack.c.h.b16 %v669
        %v711 = vunpack.c.l.b16 %v670
        %v712 = vunpack.c.h.b16 %v670
        %v713 = vunpack.c.l.b16 %v671
        %v714 = vunpack.c.h.b16 %v671
        %v715 = vunpack.c.l.b16 %v672
        %v716 = vunpack.c.h.b16 %v672
        %v717 = vunpack.c.l.b16 %v673
        %v718 = vunpack.c.h.b16 %v673
        %v719 = vunpack.c.l.b16 %v674
        %v720 = vunpack.c.h.b16 %v674
        %v721 = vunpack.c.l.b16 %v675
        %v722 = vunpack.c.h.b16 %v675
        %v723 = vunpack.c.l.b16 %v676
        %v724 = vunpack.c.h.b16 %v676
        %v725 = vunpack.c.l.b16 %v677
        %v726 = vunpack.c.h.b16 %v677
        %v727 = vunpack.c.l.b16 %v678
        %v728 = vunpack.c.h.b16 %v678
        %v729 = vunpack.c.l.b16 %v679
        %v730 = vunpack.c.h.b16 %v679
        %v731 = vunpack.c.l.b16 %v680
        %v732 = vunpack.c.h.b16 %v680
        %v733 = vunpack.c.l.b16 %v681
        %v734 = vunpack.c.h.b16 %v681
        %v735 = vunpack.c.l.b16 %v682
        %v736 = vunpack.c.h.b16 %v682
        %v737 = vpack.c.b16 %v707, %v705
        %v738 = vpack.c.b16 %v708, %v706
        %v739 = vpack.c.b16 %v711, %v709
        %v740 = vpack.c.b16 %v712, %v710
        %v741 = vpack.c.b16 %v715, %v713
        %v742 = vpack.c.b16 %v716, %v714
        %v743 = vpack.c.b16 %v719, %v717
        %v744 = vpack.c.b16 %v720, %v718
        %v745 = vpack.c.b16 %v723, %v721
        %v746 = vpack.c.b16 %v724, %v722
        %v747 = vpack.c.b16 %v727, %v725
        %v748 = vpack.c.b16 %v728, %v726
        %v749 = vpack.c.b16 %v731, %v729
        %v750 = vpack.c.b16 %v732, %v730
        %v751 = vpack.c.b16 %v735, %v733
        %v752 = vpack.c.b16 %v736, %v734
        %769 = vmatpush.bf16.msra.mxu0 %v751
        %770 = vmatpush.bf16.msra.mxu0 %v749
        %771 = vmatpush.bf16.msra.mxu0 %v747
        %772 = vmatpush.bf16.msra.mxu0 %v745
        %773 = vmatpush.bf16.msra.mxu0 %v743
        %774 = vmatpush.bf16.msra.mxu0 %v741
        %775 = vmatpush.bf16.msra.mxu0 %v739
        %776 = vmatpush.bf16.msra.mxu0 %v737
        %777 = vmatmul.bf16.gmra.mxu0 %v666
        %v778 = vpop.f32.mrf.mxu0
        %v779 = vadd.f32 %v685, %v778
        %v780 = vpop.f32.mrf.mxu0
        %781 = vdwg.mxu0
        %782 = vmatpush.bf16.msra.mxu0 %v752
        %783 = vmatpush.bf16.msra.mxu0 %v750
        %784 = vmatpush.bf16.msra.mxu0 %v748
        %785 = vmatpush.bf16.msra.mxu0 %v746
        %786 = vmatpush.bf16.msra.mxu0 %v744
        %787 = vmatpush.bf16.msra.mxu0 %v742
        %788 = vmatpush.bf16.msra.mxu0 %v740
        %789 = vmatpush.bf16.msra.mxu0 %v738
        %790 = vmatmul.bf16.gmra.mxu0 %v666
        %v791 = vpop.f32.mrf.mxu0
        %v792 = vadd.f32 %v686, %v791
        %v793 = vpop.f32.mrf.mxu0
        %794 = vdwg.mxu0
        %v795 = vmax.f32 %v792, 0.0
        %v796 = vand.u32 2147483647, %v792
        %v797 = vsub.f32 0.0, %v796
        %v798 = vmul.f32 %v797, 1.442695
        %v799 = vpow.pop %v798
        %v800 = vadd.f32 %v799, 1.0
        %v801 = vlog2.pop %v800
        %v802 = vmul.f32 %v801, 0.6931472
        %v803 = vmul.f32 -0.5, %v799
        %v804 = vadd.f32 %v803, 1.0
        %v805 = vmul.f32 %v804, %v799
        %v806 = vand.u32 2147483647, %v799
        %vm807 = vcmp.lt.f32.partialorder %v806, 0.0004427343
        %v808 = vsel %vm807, %v805, %v802
        %v809 = vadd.f32 %v795, %v808
        %810 = vst [vmem:[%s411] sm:$0xff] %v779
        %v811 = vmul.f32 %v809, 0.9
        %v812 = vadd.f32 %v811, 0.1
        %813 = vst [vmem:[%s415] sm:$0xff] %v812
        %p814 = scmp.lt.s32.totalorder %s24, 1
        %s815 = scalar_select %p814, %s24, 1
        %s816 = smul.addr %s815, 8
        %s817 = scalar_lea.vmem %s9, %s816
        %p818 = scmp.lt.s32.totalorder %s24, 1
        %s819 = scalar_select %p818, %s24, 1
        %s820 = smul.addr %s819, 8
        %s821 = scalar_lea.vmem %s10, %s820
        // Predicated region
        $region69: #{_zzzclsfier_pallas.1} parent=55 // pred_check
          %p822 = pneg %p236
        $region70: #{_zzzclsfier_pallas.1} parent=55 // pred_check_branch
          %824 = sbr.rel (%p822) target = $region72
        $region71: #{_zzzclsfier_pallas.1} parent=55 // pred_region
          _
        $region72: #{_zzzclsfier_pallas.1} parent=55 // pred_fallthru
          _
        // Predicated region
        $region73: #{_zzzclsfier_pallas.1} parent=55 // pred_check
          %p825 = pneg %p262
        $region74: #{_zzzclsfier_pallas.1} parent=55 // pred_check_branch
          %827 = sbr.rel (%p825) target = $region76
        $region75: #{_zzzclsfier_pallas.1} parent=55 // pred_region
          _
        $region76: #{_zzzclsfier_pallas.1} parent=55 // pred_fallthru
          _
      $region56: #{_zzzclsfier_pallas.1} parent=5 // pred_fallthru
        _
      %p828 = scmp.le.s32.totalorder 2, %s19
      // Predicated region
      $region77: #{_zzzclsfier_pallas.1} parent=5 // pred_check
        %p829 = pneg %p828
      $region78: #{_zzzclsfier_pallas.1} parent=5 // pred_check_branch
        %831 = sbr.rel (%p829) target = $region80
      $region79: #{_zzzclsfier_pallas.1} parent=5 // pred_region
        %s832 = ssub.s32 %s19, 2
        // Predicated region
        $region81: #{_zzzclsfier_pallas.1} parent=79 // pred_check
          %p833 = pneg %p242
        $region82: #{_zzzclsfier_pallas.1} parent=79 // pred_check_branch
          %835 = sbr.rel (%p833) target = $region84
        $region83: #{_zzzclsfier_pallas.1} parent=79 // pred_region
          %p836 = scmp.lt.s32.totalorder %s25, 1
          %s837 = scalar_select %p836, %s25, 1
          %s838 = smul.addr %s837, 8
          %s839 = scalar_lea.vmem %s9, %s838
        $region84: #{_zzzclsfier_pallas.1} parent=79 // pred_fallthru
          _
        // Predicated region
        $region85: #{_zzzclsfier_pallas.1} parent=79 // pred_check
          %p840 = pneg %p268
        $region86: #{_zzzclsfier_pallas.1} parent=79 // pred_check_branch
          %842 = sbr.rel (%p840) target = $region88
        $region87: #{_zzzclsfier_pallas.1} parent=79 // pred_region
          %p843 = scmp.lt.s32.totalorder %s25, 1
          %s844 = scalar_select %p843, %s25, 1
          %s845 = smul.addr %s844, 8
          %s846 = scalar_lea.vmem %s10, %s845
        $region88: #{_zzzclsfier_pallas.1} parent=79 // pred_fallthru
          _
      $region80: #{_zzzclsfier_pallas.1} parent=5 // pred_fallthru
        _
    $region6: #{_zzzclsfier_pallas.1} parent=1 // loop_footer
      %s23 = sadd.s32 1, %s19
    $region7: #{_zzzclsfier_pallas.1} parent=1 // loop_footer_branch
      %18 = sbr.rel target = $region3
    $region8: #{_zzzclsfier_pallas.1} parent=1 // loop_exit
      _
    %847 = vsyncpa [#allocation3], 1
    %s848 = scalar_lea.sflag [#allocation3], 1
    %849 = vsyncpa %s848, 1
    %850 = vsyncpa [#allocation5], 1

</llo_original>
